<compile_context>
chip_gen: v7x
topology: tpu7x:2x2x1
jax: 0.10.0
libtpu: 0.0.40
codegen_flags: <defaults>
</compile_context>

<pallas_src>
import jax
import jax.numpy as jnp
from jax.experimental import pallas as pl
from jax.experimental.pallas import tpu as pltpu


def _make_hopfield_kernel(beta, e_valid, e_pad, te):
    """Fused (QK^T -> online softmax over E -> @V) kernel; beta baked in."""
    mask_needed = e_pad != e_valid
    n_e_tiles = e_pad // te

    def kernel(q_ref, k_ref, o_ref, m_sc, l_sc, acc_sc):
        # q_ref: [TS, D], k_ref: [TE, D] (K == V), o_ref: [TS, D]
        e = pl.program_id(1)

        @pl.when(e == 0)
        def _init():
            m_sc[...] = jnp.full_like(m_sc, -jnp.inf)
            l_sc[...] = jnp.zeros_like(l_sc)
            acc_sc[...] = jnp.zeros_like(acc_sc)

        k = k_ref[...]
        # Fold beta into the small [TS, D] operand instead of the [TS, TE] scores.
        q = (q_ref[...].astype(jnp.float32) * jnp.float32(beta)).astype(k.dtype)

        # scores[a, d] = sum_c Q[a, c] * K[d, c]  ("ac,dc->ad"); f32 MXU accumulation.
        # D stays at its true (narrow) width; Mosaic pads the contraction in VMEM only.
        s = jax.lax.dot_general(
            q, k,
            dimension_numbers=(((1,), (1,)), ((), ())),
            preferred_element_type=jnp.float32,
        )

        if mask_needed:
            # Padded K rows (global column >= e_valid) must not enter the softmax.
            # -1e30 is finite (scores are f32) so the running max stays finite;
            # every E tile holds at least one valid row by construction.
            col = e * te + jax.lax.broadcasted_iota(jnp.int32, s.shape, 1)
            s = jnp.where(col < e_valid, s, jnp.float32(-1e30))

        # Online (flash-style) softmax over the E axis.
        m_prev = m_sc[...]
        m_new = jnp.maximum(m_prev, jnp.max(s, axis=1, keepdims=True))
        alpha = jnp.exp(m_prev - m_new)            # exp(-inf - finite) = 0 on the first tile
        p = jnp.exp(s - m_new)
        l_sc[...] = alpha * l_sc[...] + jnp.sum(p, axis=1, keepdims=True)
        # Un-normalized mapped = p @ V (V == K); normalization deferred to the end.
        acc_sc[...] = alpha * acc_sc[...] + jnp.dot(
            p.astype(k.dtype), k, preferred_element_type=jnp.float32)
        m_sc[...] = m_new

        @pl.when(e == n_e_tiles - 1)
        def _finalize():
            # Exact f32 division (the approximate EUP reciprocal caused the previous
            # accuracy failure).  One [TS, D] rescale instead of a [TS, E] multiply.
            o_ref[...] = (acc_sc[...] / l_sc[...]).astype(o_ref.dtype)

    return kernel


def hopfield_sampling(base, sample, beta, *, matmul_dtype=jnp.float32, e_tile=None):
    """base: [E, T, C], sample: [S, T, C], beta: python float -> [S, T, C]."""
    E, T, C = base.shape
    S = sample.shape[0]
    D = T * C

    # --- S tiling: sublane-aligned; >= 2 grid steps once S >= 16 so the "parallel"
    #     axis spans both TensorCores on v7x; cap at 256 to fill the 256-wide MXU
    #     on v6e/v7x (v5e's 128x128 MXU saturates earlier — 128 would also be fine).
    if S < 16:
        TS = 8 * pl.cdiv(S, 8)
    else:
        TS = min(256, 8 * pl.cdiv(S, 16))
    S_pad = TS * pl.cdiv(S, TS)

    # --- E tiling: bounds VMEM/vreg footprint independent of E (online softmax).
    e_aligned = 8 * pl.cdiv(E, 8)
    if e_tile is None:
        TE = min(e_aligned, 512)
    else:
        TE = 8 * pl.cdiv(min(e_tile, e_aligned), 8)
    E_pad = TE * pl.cdiv(E, TE)
    n_e_tiles = E_pad // TE

    # Tiny (D-wide) row padding only; no lane (D -> 128) padding in HBM.
    q = sample.reshape(S, D).astype(matmul_dtype)
    if S_pad != S:
        q = jnp.pad(q, ((0, S_pad - S), (0, 0)))
    k = base.reshape(E, D).astype(matmul_dtype)
    if E_pad != E:
        k = jnp.pad(k, ((0, E_pad - E), (0, 0)))

    kernel = _make_hopfield_kernel(float(beta), E, E_pad, TE)

    if n_e_tiles == 1:
        # K = V never changes across the grid -> single-buffer it (halves its VMEM).
        k_spec = pl.BlockSpec((TE, D), lambda i, e: (e, 0),
                              pipeline_mode=pl.Buffered(1))
    else:
        k_spec = pl.BlockSpec((TE, D), lambda i, e: (e, 0))

    out_flat = pl.pallas_call(
        kernel,
        out_shape=jax.ShapeDtypeStruct((S_pad, D), jnp.float32),
        grid_spec=pltpu.PrefetchScalarGridSpec(
            num_scalar_prefetch=0,
            grid=(S_pad // TS, n_e_tiles),          # reduction (E) axis last
            in_specs=[
                pl.BlockSpec((TS, D), lambda i, e: (i, 0)),   # Q tile (resident over E)
                k_spec,                                       # K = V tile
            ],
            out_specs=pl.BlockSpec((TS, D), lambda i, e: (i, 0)),
            scratch_shapes=[
                pltpu.VMEM((TS, 1), jnp.float32),   # running max m
                pltpu.VMEM((TS, 1), jnp.float32),   # running denom l
                pltpu.VMEM((TS, D), jnp.float32),   # un-normalized accumulator
            ],
        ),
        compiler_params=pltpu.CompilerParams(
            dimension_semantics=("parallel", "arbitrary"),
        ),
    )(q, k)

    return out_flat[:S].reshape(S, T, C)


def _reference(base, sample, beta):
    E, T, C = base.shape
    S = sample.shape[0]
    K = base.reshape(E, T * C).astype(jnp.float32)
    Q = sample.reshape(S, T * C).astype(jnp.float32)
    # HIGHEST precision so the baseline itself is not bf16-degraded on TPU.
    scores = jnp.einsum("ac,dc->ad", Q, K, precision=jax.lax.Precision.HIGHEST)
    p = jax.nn.softmax(beta * scores, axis=1)
    mapped = jnp.einsum("ac,cb->ab", p, K, precision=jax.lax.Precision.HIGHEST)
    return mapped.reshape(S, T, C)


if __name__ == "__main__":
    # Shapes consistent with the module's usage: time_steps=11, channels=1,
    # E "base" examples (year 2018), S known samples (year 2016/17), beta=5
    # (the forward is invoked as H(base, known, 5)).
    key = jax.random.PRNGKey(0)
    k_base, k_sample, k_base2, k_sample2 = jax.random.split(key, 4)

    E, S, T, C = 16, 8, 11, 1
    beta = 5.0

    base = jax.random.normal(k_base, (E, T, C), dtype=jnp.float32)
    sample = jax.random.normal(k_sample, (S, T, C), dtype=jnp.float32)

    mapped = jax.block_until_ready(hopfield_sampling(base, sample, beta))
    ref = _reference(base, sample, beta)
    assert mapped.shape == (S, T, C)
    # Tolerance covers the MXU's multi-pass f32 emulation under the exp(beta * score)
    # amplification (beta=5, |score| up to ~50); softmax math itself is exact f32.
    err = float(jnp.max(jnp.abs(mapped - ref)))
    assert jnp.allclose(mapped, ref, atol=2e-2, rtol=2e-2), err

    # Second check: exercises the E-tiled online-softmax path (multiple K tiles,
    # E-row masking, multiple / padded S tiles, default K double-buffering).
    E2, S2 = 40, 24
    base2 = jax.random.normal(k_base2, (E2, T, C), dtype=jnp.float32)
    sample2 = jax.random.normal(k_sample2, (S2, T, C), dtype=jnp.float32)
    mapped2 = jax.block_until_ready(
        hopfield_sampling(base2, sample2, beta, e_tile=16))
    ref2 = _reference(base2, sample2, beta)
    err2 = float(jnp.max(jnp.abs(mapped2 - ref2)))
    assert mapped2.shape == (S2, T, C)
    assert jnp.allclose(mapped2, ref2, atol=2e-2, rtol=2e-2), err2

    print("KERNEL_OK")
</pallas_src>

<mosaic_0001>
module attributes {stable_mosaic.version = 11 : i64} {
  func.func @kernel(%arg0: i32, %arg1: i32, %arg2: memref<8x11xf32, #tpu.memory_space<vmem>>, %arg3: memref<16x11xf32, #tpu.memory_space<vmem>>, %arg4: memref<8x11xf32, #tpu.memory_space<vmem>>, %arg5: memref<8x1xf32, #tpu.memory_space<vmem>>, %arg6: memref<8x1xf32, #tpu.memory_space<vmem>>, %arg7: memref<8x11xf32, #tpu.memory_space<vmem>>) attributes {dimension_semantics = [#tpu.dimension_semantics<parallel>, #tpu.dimension_semantics<arbitrary>], iteration_bounds = array<i64: 1, 1>, scalar_prefetch = 0 : i64, scratch_operands = 3 : i64, tpu.core_type = #tpu.core_type<tc>, window_params = [{transform_indices = @transform_0, window_bounds = array<i64: 8, 11>}, {pipeline_mode = #tpu.pipeline_mode<synchronous>, transform_indices = @transform_1, window_bounds = array<i64: 16, 11>}, {transform_indices = @transform_2, window_bounds = array<i64: 8, 11>}]} {
    %c0_i32 = arith.constant 0 : i32
    %0 = arith.cmpi eq, %arg1, %c0_i32 : i32
    %1 = arith.extui %0 : i1 to i32
    %c0_i32_0 = arith.constant 0 : i32
    %2 = arith.cmpi ne, %1, %c0_i32_0 : i32
    scf.if %2 {
      %cst_22 = arith.constant 0xFF800000 : f32
      %33 = vector.broadcast %cst_22 : f32 to vector<8x1xf32>
      %c0_23 = arith.constant 0 : index
      %c0_24 = arith.constant 0 : index
      %34 = vector.load %arg5[%c0_23, %c0_24] : memref<8x1xf32, #tpu.memory_space<vmem>>, vector<8x1xf32>
      tpu.vector_store %arg5[%c0_23, %c0_24], %33 {strides = array<i32>} : memref<8x1xf32, #tpu.memory_space<vmem>>, vector<8x1xf32>,
      %cst_25 = arith.constant 0.000000e+00 : f32
      %35 = vector.broadcast %cst_25 : f32 to vector<8x1xf32>
      %c0_26 = arith.constant 0 : index
      %c0_27 = arith.constant 0 : index
      %36 = vector.load %arg6[%c0_26, %c0_27] : memref<8x1xf32, #tpu.memory_space<vmem>>, vector<8x1xf32>
      tpu.vector_store %arg6[%c0_26, %c0_27], %35 {strides = array<i32>} : memref<8x1xf32, #tpu.memory_space<vmem>>, vector<8x1xf32>,
      %cst_28 = arith.constant 0.000000e+00 : f32
      %37 = vector.broadcast %cst_28 : f32 to vector<8x11xf32>
      %c0_29 = arith.constant 0 : index
      %c0_30 = arith.constant 0 : index
      %38 = vector.load %arg7[%c0_29, %c0_30] : memref<8x11xf32, #tpu.memory_space<vmem>>, vector<8x11xf32>
      tpu.vector_store %arg7[%c0_29, %c0_30], %37 {strides = array<i32>} : memref<8x11xf32, #tpu.memory_space<vmem>>, vector<8x11xf32>,
    } else {
    }
    %c0 = arith.constant 0 : index
    %c0_1 = arith.constant 0 : index
    %3 = vector.load %arg3[%c0, %c0_1] : memref<16x11xf32, #tpu.memory_space<vmem>>, vector<16x11xf32>
    %c0_2 = arith.constant 0 : index
    %c0_3 = arith.constant 0 : index
    %4 = vector.load %arg2[%c0_2, %c0_3] : memref<8x11xf32, #tpu.memory_space<vmem>>, vector<8x11xf32>
    %cst = arith.constant 5.000000e+00 : f32
    %5 = vector.broadcast %cst : f32 to vector<8x11xf32>
    %6 = arith.mulf %4, %5 : vector<8x11xf32>
    %cst_4 = arith.constant dense<0.000000e+00> : vector<8x16xf32>
    %7 = tpu.matmul %6, %3, %cst_4 {dimension_numbers = #tpu.dot_dimension_numbers<[1], [1], [0], [0], [0, 0, 1, 0], [], []>} : vector<8x11xf32>, vector<16x11xf32>, vector<8x16xf32> -> vector<8x16xf32>
    %c0_5 = arith.constant 0 : index
    %c0_6 = arith.constant 0 : index
    %8 = vector.load %arg5[%c0_5, %c0_6] : memref<8x1xf32, #tpu.memory_space<vmem>>, vector<8x1xf32>
    %cst_7 = arith.constant dense<0xFF800000> : vector<8xf32>
    %9 = vector.multi_reduction <maximumf>, %7, %cst_7 [1] : vector<8x16xf32> to vector<8xf32>
    %10 = vector.shape_cast %9 : vector<8xf32> to vector<8x1xf32>
    %11 = arith.maximumf %8, %10 : vector<8x1xf32>
    %12 = arith.subf %8, %11 : vector<8x1xf32>
    %13 = math.exp %12 : vector<8x1xf32>
    %14 = vector.broadcast %11 : vector<8x1xf32> to vector<8x16xf32>
    %15 = arith.subf %7, %14 : vector<8x16xf32>
    %16 = math.exp %15 : vector<8x16xf32>
    %c0_8 = arith.constant 0 : index
    %c0_9 = arith.constant 0 : index
    %17 = vector.load %arg6[%c0_8, %c0_9] : memref<8x1xf32, #tpu.memory_space<vmem>>, vector<8x1xf32>
    %18 = arith.mulf %13, %17 : vector<8x1xf32>
    %cst_10 = arith.constant dense<0.000000e+00> : vector<8xf32>
    %19 = vector.multi_reduction <add>, %16, %cst_10 [1] : vector<8x16xf32> to vector<8xf32>
    %20 = vector.shape_cast %19 : vector<8xf32> to vector<8x1xf32>
    %21 = arith.addf %18, %20 : vector<8x1xf32>
    %c0_11 = arith.constant 0 : index
    %c0_12 = arith.constant 0 : index
    %22 = vector.load %arg6[%c0_11, %c0_12] : memref<8x1xf32, #tpu.memory_space<vmem>>, vector<8x1xf32>
    tpu.vector_store %arg6[%c0_11, %c0_12], %21 {strides = array<i32>} : memref<8x1xf32, #tpu.memory_space<vmem>>, vector<8x1xf32>,
    %c0_13 = arith.constant 0 : index
    %c0_14 = arith.constant 0 : index
    %23 = vector.load %arg7[%c0_13, %c0_14] : memref<8x11xf32, #tpu.memory_space<vmem>>, vector<8x11xf32>
    %24 = vector.broadcast %13 : vector<8x1xf32> to vector<8x11xf32>
    %25 = arith.mulf %24, %23 : vector<8x11xf32>
    %cst_15 = arith.constant dense<0.000000e+00> : vector<8x11xf32>
    %26 = tpu.matmul %16, %3, %cst_15 {dimension_numbers = #tpu.dot_dimension_numbers<[1], [0], [0], [1], [0, 0, 1, 1], [], []>} : vector<8x16xf32>, vector<16x11xf32>, vector<8x11xf32> -> vector<8x11xf32>
    %27 = arith.addf %25, %26 : vector<8x11xf32>
    %c0_16 = arith.constant 0 : index
    %c0_17 = arith.constant 0 : index
    %28 = vector.load %arg7[%c0_16, %c0_17] : memref<8x11xf32, #tpu.memory_space<vmem>>, vector<8x11xf32>
    tpu.vector_store %arg7[%c0_16, %c0_17], %27 {strides = array<i32>} : memref<8x11xf32, #tpu.memory_space<vmem>>, vector<8x11xf32>,
    %c0_18 = arith.constant 0 : index
    %c0_19 = arith.constant 0 : index
    %29 = vector.load %arg5[%c0_18, %c0_19] : memref<8x1xf32, #tpu.memory_space<vmem>>, vector<8x1xf32>
    tpu.vector_store %arg5[%c0_18, %c0_19], %11 {strides = array<i32>} : memref<8x1xf32, #tpu.memory_space<vmem>>, vector<8x1xf32>,
    %c0_i32_20 = arith.constant 0 : i32
    %30 = arith.cmpi eq, %arg1, %c0_i32_20 : i32
    %31 = arith.extui %30 : i1 to i32
    %c0_i32_21 = arith.constant 0 : i32
    %32 = arith.cmpi ne, %31, %c0_i32_21 : i32
    scf.if %32 {
      %c0_22 = arith.constant 0 : index
      %c0_23 = arith.constant 0 : index
      %33 = vector.load %arg7[%c0_22, %c0_23] : memref<8x11xf32, #tpu.memory_space<vmem>>, vector<8x11xf32>
      %c0_24 = arith.constant 0 : index
      %c0_25 = arith.constant 0 : index
      %34 = vector.load %arg6[%c0_24, %c0_25] : memref<8x1xf32, #tpu.memory_space<vmem>>, vector<8x1xf32>
      %35 = vector.broadcast %34 : vector<8x1xf32> to vector<8x11xf32>
      %36 = arith.divf %33, %35 : vector<8x11xf32>
      %c0_26 = arith.constant 0 : index
      %c0_27 = arith.constant 0 : index
      %37 = vector.load %arg4[%c0_26, %c0_27] : memref<8x11xf32, #tpu.memory_space<vmem>>, vector<8x11xf32>
      tpu.vector_store %arg4[%c0_26, %c0_27], %36 {strides = array<i32>} : memref<8x11xf32, #tpu.memory_space<vmem>>, vector<8x11xf32>,
    } else {
    }
    return
  }
  func.func @transform_0(%arg0: i32, %arg1: i32) -> (i32, i32) {
    %c0_i32 = arith.constant 0 : i32
    %c0_i32_0 = arith.constant 0 : i32
    return %arg0, %c0_i32 : i32, i32
  }
  func.func @transform_1(%arg0: i32, %arg1: i32) -> (i32, i32) {
    %c0_i32 = arith.constant 0 : i32
    %c0_i32_0 = arith.constant 0 : i32
    return %arg1, %c0_i32 : i32, i32
  }
  func.func @transform_2(%arg0: i32, %arg1: i32) -> (i32, i32) {
    %c0_i32 = arith.constant 0 : i32
    %c0_i32_0 = arith.constant 0 : i32
    return %arg0, %c0_i32 : i32, i32
  }
}

</mosaic_0001>

<llo_original>
// kernel: tpu_custom_call.1
$region0: #{tpu_custom_call.1}
  #allocation0 [shape = 'u32[]', space=smem, size = 0x4, offset = 0x4, fixed_abs, tag = 'smem constant byte address 0x4 - core index']
  #allocation1 [shape = 'u32[144,128]{1,0:T(1,128)}', space=vmem, size = 0x12000, scoped, tag = 'internal scratch']
  #allocation2 [shape = 'f32[8,1]{1,0:T(8,128)}', space=vmem, size = 0x1000, scoped, tag = 'scratch operand']
  #allocation3 [shape = 'f32[8,1]{1,0:T(8,128)}', space=vmem, size = 0x1000, scoped, tag = 'scratch operand']
  #allocation4 [shape = 'f32[8,11]{1,0:T(8,128)}', space=vmem, size = 0x1000, scoped, tag = 'scratch operand']
  %s0 = inlined_call_operand.hbm [shape: f32[8,11], index: 0, kind: input, shape index: {}]
  %s1 = inlined_call_operand.hbm [shape: f32[16,11], index: 1, kind: input, shape index: {}]
  %s2 = inlined_call_operand.hbm [shape: f32[8,11], index: 2, kind: output, shape index: {}]
  %s3 = sld [smem:[#allocation0]]
  $region34: #{tpu_custom_call.1} parent=0
    _
  %s5 = ssub.s32 1, %s3
  %s6 = scalar_select 0, %s5, %s3
  $region1: #{tpu_custom_call.1} parent=0
    #allocation5 [shape = 'u8[4096]{0}', space=vmem, size = 0x1000, scoped, tag = 'input window, operand 0, single buffered']
    #allocation6 [shape = 's32[1]{0}', space=sflag, size = 0x4, scoped, tag = 'scoped memory for tpu_custom_call.1']
    #allocation7 [shape = 's32[1]{0}', space=sflag, size = 0x4, scoped, tag = 'scoped memory for tpu_custom_call.1']
    #allocation8 [shape = 'u8[8192]{0}', space=vmem, size = 0x2000, scoped, tag = 'input window, operand 1, single buffered']
    #allocation9 [shape = 's32[1]{0}', space=sflag, size = 0x4, scoped, tag = 'scoped memory for tpu_custom_call.1']
    #allocation10 [shape = 'u8[4096]{0}', space=vmem, size = 0x1000, scoped, tag = 'output window, operand 0, single buffered']
    %7 = vsyncpa [#allocation6], 0
    %8 = vsyncpa [#allocation9], 0
    %9 = vsyncpa [#allocation7], 0
    // Predicated region
    $region2: #{tpu_custom_call.1} parent=1 // pred_check
      _
    $region3: #{tpu_custom_call.1} parent=1 // pred_check_branch
      %11 = sbr.rel (0) target = $region5
    $region4: #{tpu_custom_call.1} parent=1 // pred_region
      %s13 = ssub.s32 128, 128
      %14 = vsyncadd [#allocation6], %s13
      %s16 = sshll.u32 [#allocation5], 4
      %s17 = int_to_ptr.vmem [resolvable:$true] %s16
      %19 = dma.hbm_to_vmem [thread:$0]  %s0, 128, %s17, [#allocation6]
    $region5: #{tpu_custom_call.1} parent=1 // pred_fallthru
      _
    // Predicated region
    $region6: #{tpu_custom_call.1} parent=1 // pred_check
      _
    $region7: #{tpu_custom_call.1} parent=1 // pred_check_branch
      %21 = sbr.rel (0) target = $region9
    $region8: #{tpu_custom_call.1} parent=1 // pred_region
      %s23 = ssub.s32 256, 256
      %24 = vsyncadd [#allocation9], %s23
      %s25 = sshll.u32 [#allocation8], 4
      %s26 = int_to_ptr.vmem [resolvable:$true] %s25
      %31 = dma.hbm_to_vmem [thread:$0]  %s1, 256, %s26, [#allocation9], 128, 128, 8
    $region9: #{tpu_custom_call.1} parent=1 // pred_fallthru
      _
    // Predicated region
    $region10: #{tpu_custom_call.1} parent=1 // pred_check
      _
    $region11: #{tpu_custom_call.1} parent=1 // pred_check_branch
      %33 = sbr.rel (0) target = $region13
    $region12: #{tpu_custom_call.1} parent=1 // pred_region
      %34 = dma.done [#allocation6], 128
    $region13: #{tpu_custom_call.1} parent=1 // pred_fallthru
      _
    // Predicated region
    $region14: #{tpu_custom_call.1} parent=1 // pred_check
      _
    $region15: #{tpu_custom_call.1} parent=1 // pred_check_branch
      %36 = sbr.rel (0) target = $region17
    $region16: #{tpu_custom_call.1} parent=1 // pred_region
      %37 = dma.done [#allocation9], 256
    $region17: #{tpu_custom_call.1} parent=1 // pred_fallthru
      _
    %p38 = scmp.eq.s32.totalorder 0, 0
    // Predicated region
    $region18: #{tpu_custom_call.1} parent=1 // pred_check
      %p39 = pneg %p38
    $region19: #{tpu_custom_call.1} parent=1 // pred_check_branch
      %41 = sbr.rel (%p39) target = $region21
    $region20: #{tpu_custom_call.1} parent=1 // pred_region
      %vm42 = vcmask 7168
      %43 = vst.msk [vmem:[#allocation2] sm:$0xff] %vm42, -inf
      %44 = vst.msk [vmem:[#allocation3] sm:$0xff] %vm42, 0.0
      %vm45 = vcmask 89088
      %46 = vst.msk [vmem:[#allocation4] sm:$0xff] %vm45, 0.0
    $region21: #{tpu_custom_call.1} parent=1 // pred_fallthru
      _
    %v47 = vld [vmem:[#allocation8] sm:$0xff]
    %v48 = vld [vmem:[#allocation8 + $0x8] sm:$0xff]
    %v49 = vld [vmem:[#allocation5] sm:$0xff]
    %v50 = vmul.f32 %v49, 5.0
    %vm51 = vcmask 89088
    %v53 = vsel %vm51, %v50, 0
    %v56 = vsel %vm51, %v47, 0
    %v59 = vsel %vm51, %v48, 0
    %61 = vmatprep.subr.mxu0 0.0
    %62 = vmatpush1.xpose.msra.mxu0 %v56
    %63 = vmatprep.subr.mxu0 0.0
    %64 = vmatpush1.xpose.msra.mxu0 %v59
    %65 = vmatprep.subr.mxu0 0.0
    %66 = vmatpush1.xpose.msra.mxu0 0.0
    %67 = vmatprep.subr.mxu0 0.0
    %68 = vmatpush1.xpose.msra.mxu0 0.0
    %69 = vmatprep.subr.mxu0 0.0
    %70 = vmatpush1.xpose.msra.mxu0 0.0
    %71 = vmatprep.subr.mxu0 0.0
    %72 = vmatpush1.xpose.msra.mxu0 0.0
    %73 = vmatprep.subr.mxu0 0.0
    %74 = vmatpush1.xpose.msra.mxu0 0.0
    %75 = vmatprep.subr.mxu0 0.0
    %76 = vmatpush1.xpose.msra.mxu0 0.0
    %77 = vmatprep.subr.mxu0 0.0
    %78 = vmatpush1.xpose.msra.mxu0 0.0
    %79 = vmatprep.subr.mxu0 0.0
    %80 = vmatpush1.xpose.msra.mxu0 0.0
    %81 = vmatprep.subr.mxu0 0.0
    %82 = vmatpush1.xpose.msra.mxu0 0.0
    %83 = vmatprep.subr.mxu0 0.0
    %84 = vmatpush1.xpose.msra.mxu0 0.0
    %85 = vmatprep.subr.mxu0 0.0
    %86 = vmatpush1.xpose.msra.mxu0 0.0
    %87 = vmatprep.subr.mxu0 0.0
    %88 = vmatpush1.xpose.msra.mxu0 0.0
    %89 = vmatprep.subr.mxu0 0.0
    %90 = vmatpush1.xpose.msra.mxu0 0.0
    %91 = vmatprep.subr.mxu0 0.0
    %92 = vmatpush1.xpose.msra.mxu0 0.0
    %93 = vmatprep.subr.mxu0 0.0
    %94 = vmatpush1.xpose.msra.mxu0 0.0
    %95 = vmatprep.subr.mxu0 0.0
    %96 = vmatpush1.xpose.msra.mxu0 0.0
    %97 = vmatprep.subr.mxu0 0.0
    %98 = vmatpush1.xpose.msra.mxu0 0.0
    %99 = vmatprep.subr.mxu0 0.0
    %100 = vmatpush1.xpose.msra.mxu0 0.0
    %101 = vmatprep.subr.mxu0 0.0
    %102 = vmatpush1.xpose.msra.mxu0 0.0
    %103 = vmatprep.subr.mxu0 0.0
    %104 = vmatpush1.xpose.msra.mxu0 0.0
    %105 = vmatprep.subr.mxu0 0.0
    %106 = vmatpush1.xpose.msra.mxu0 0.0
    %107 = vmatprep.subr.mxu0 0.0
    %108 = vmatpush1.xpose.msra.mxu0 0.0
    %109 = vmatprep.subr.mxu0 0.0
    %110 = vmatpush1.xpose.msra.mxu0 0.0
    %111 = vmatprep.subr.mxu0 0.0
    %112 = vmatpush1.xpose.msra.mxu0 0.0
    %113 = vmatprep.subr.mxu0 0.0
    %114 = vmatpush1.xpose.msra.mxu0 0.0
    %115 = vmatprep.subr.mxu0 0.0
    %116 = vmatpush1.xpose.msra.mxu0 0.0
    %117 = vmatprep.subr.mxu0 0.0
    %118 = vmatpush1.xpose.msra.mxu0 0.0
    %119 = vmatprep.subr.mxu0 0.0
    %120 = vmatpush1.xpose.msra.mxu0 0.0
    %121 = vmatprep.subr.mxu0 0.0
    %122 = vmatpush1.xpose.msra.mxu0 0.0
    %123 = vmatprep.subr.mxu0 0.0
    %124 = vmatpush1.xpose.msra.mxu0 0.0
    %125 = vmatprep.mubr.f32.mxu0 0.0
    %126 = vmatmul.mubr.f32.gmra.mrb[0].mxu0 %v53
    %v127 = vpop.f32.mrb[0].mxu0
    %v128 = vadd.f32 0.0, %v127
    %v129 = vpop.f32.mrb[0].mxu0
    %130 = vdwg.mxu0
    %v131 = vld [vmem:[#allocation2] sm:$0xff]
    %vm132 = vcmask 130048
    %v133 = vsel %vm132, %v128, -inf
    %134 = vmax.xlane.f32.xlu0 %v133
    %v135 = vpop.xlane.xlu0 %134
    %v136 = vmax.f32 %v131, %v135
    %v137 = vsub.f32 %v131, %v136
    %v138 = vmul.f32 %v137, 1.442695
    %v139 = vpow.pop %v138
    %141 = vset.pattern.permute.xlu0 0
    %142 = vperm.xlu0 %141, %v136
    %v143 = vpop.permute.xlu0 %142
    %v145 = vsub.f32 %v128, %v143
    %v146 = vmul.f32 %v145, 1.442695
    %v147 = vpow.pop %v146
    %v148 = vld [vmem:[#allocation3] sm:$0xff]
    %v149 = vmul.f32 %v139, %v148
    %v150 = vsel %vm132, %v147, 0.0
    %151 = vadd.xlane.f32.xlu0 %v150
    %v152 = vpop.xlane.xlu0 %151
    %v153 = vadd.f32 %v149, %v152
    %vm154 = vcmask 7168
    %155 = vst.msk [vmem:[#allocation3] sm:$0xff] %vm154, %v153
    %v156 = vld [vmem:[#allocation4] sm:$0xff]
    %158 = vset.pattern.permute.xlu0 0
    %159 = vperm.xlu0 %158, %v139
    %v160 = vpop.permute.xlu0 %159
    %v162 = vmul.f32 %v160, %v156
    %v164 = vsel %vm132, %v147, 0
    %166 = vmatprep.subr.mxu0 0.0
    %167 = vmatpush1.msra.mxu0 %v47
    %168 = vmatprep.subr.mxu0 0.0
    %169 = vmatpush1.msra.mxu0 %v48
    %170 = vmatprep.subr.mxu0 0.0
    %171 = vmatpush1.msra.mxu0 0.0
    %172 = vmatprep.subr.mxu0 0.0
    %173 = vmatpush1.msra.mxu0 0.0
    %174 = vmatprep.subr.mxu0 0.0
    %175 = vmatpush1.msra.mxu0 0.0
    %176 = vmatprep.subr.mxu0 0.0
    %177 = vmatpush1.msra.mxu0 0.0
    %178 = vmatprep.subr.mxu0 0.0
    %179 = vmatpush1.msra.mxu0 0.0
    %180 = vmatprep.subr.mxu0 0.0
    %181 = vmatpush1.msra.mxu0 0.0
    %182 = vmatprep.subr.mxu0 0.0
    %183 = vmatpush1.msra.mxu0 0.0
    %184 = vmatprep.subr.mxu0 0.0
    %185 = vmatpush1.msra.mxu0 0.0
    %186 = vmatprep.subr.mxu0 0.0
    %187 = vmatpush1.msra.mxu0 0.0
    %188 = vmatprep.subr.mxu0 0.0
    %189 = vmatpush1.msra.mxu0 0.0
    %190 = vmatprep.subr.mxu0 0.0
    %191 = vmatpush1.msra.mxu0 0.0
    %192 = vmatprep.subr.mxu0 0.0
    %193 = vmatpush1.msra.mxu0 0.0
    %194 = vmatprep.subr.mxu0 0.0
    %195 = vmatpush1.msra.mxu0 0.0
    %196 = vmatprep.subr.mxu0 0.0
    %197 = vmatpush1.msra.mxu0 0.0
    %198 = vmatprep.subr.mxu0 0.0
    %199 = vmatpush1.msra.mxu0 0.0
    %200 = vmatprep.subr.mxu0 0.0
    %201 = vmatpush1.msra.mxu0 0.0
    %202 = vmatprep.subr.mxu0 0.0
    %203 = vmatpush1.msra.mxu0 0.0
    %204 = vmatprep.subr.mxu0 0.0
    %205 = vmatpush1.msra.mxu0 0.0
    %206 = vmatprep.subr.mxu0 0.0
    %207 = vmatpush1.msra.mxu0 0.0
    %208 = vmatprep.subr.mxu0 0.0
    %209 = vmatpush1.msra.mxu0 0.0
    %210 = vmatprep.subr.mxu0 0.0
    %211 = vmatpush1.msra.mxu0 0.0
    %212 = vmatprep.subr.mxu0 0.0
    %213 = vmatpush1.msra.mxu0 0.0
    %214 = vmatprep.subr.mxu0 0.0
    %215 = vmatpush1.msra.mxu0 0.0
    %216 = vmatprep.subr.mxu0 0.0
    %217 = vmatpush1.msra.mxu0 0.0
    %218 = vmatprep.subr.mxu0 0.0
    %219 = vmatpush1.msra.mxu0 0.0
    %220 = vmatprep.subr.mxu0 0.0
    %221 = vmatpush1.msra.mxu0 0.0
    %222 = vmatprep.subr.mxu0 0.0
    %223 = vmatpush1.msra.mxu0 0.0
    %224 = vmatprep.subr.mxu0 0.0
    %225 = vmatpush1.msra.mxu0 0.0
    %226 = vmatprep.subr.mxu0 0.0
    %227 = vmatpush1.msra.mxu0 0.0
    %228 = vmatprep.subr.mxu0 0.0
    %229 = vmatpush1.msra.mxu0 0.0
    %230 = vmatprep.mubr.f32.mxu0 0.0
    %231 = vmatmul.mubr.f32.gmra.mrb[0].mxu0 %v164
    %v232 = vpop.f32.mrb[0].mxu0
    %v233 = vadd.f32 0.0, %v232
    %v234 = vpop.f32.mrb[0].mxu0
    %235 = vdwg.mxu0
    %v236 = vadd.f32 %v162, %v233
    %237 = vst.msk [vmem:[#allocation4] sm:$0xff] %vm51, %v236
    %238 = vst.msk [vmem:[#allocation2] sm:$0xff] %vm154, %v136
    // Predicated region
    $region22: #{tpu_custom_call.1} parent=1 // pred_check
      %p239 = pneg %p38
    $region23: #{tpu_custom_call.1} parent=1 // pred_check_branch
      %241 = sbr.rel (%p239) target = $region25
    $region24: #{tpu_custom_call.1} parent=1 // pred_region
      %v242 = vld [vmem:[#allocation4] sm:$0xff]
      %v243 = vld [vmem:[#allocation3] sm:$0xff]
      %245 = vset.pattern.permute.xlu0 0
      %246 = vperm.xlu0 %245, %v243
      %v247 = vpop.permute.xlu0 %246
      %v249 = vrcp.pop %v247
      %v250 = vmul.f32 %v242, %v249
      %251 = vst.msk [vmem:[#allocation10] sm:$0xff] %vm51, %v250
    $region25: #{tpu_custom_call.1} parent=1 // pred_fallthru
      _
    // Predicated region
    $region26: #{tpu_custom_call.1} parent=1 // pred_check
      _
    $region27: #{tpu_custom_call.1} parent=1 // pred_check_branch
      %253 = sbr.rel (0) target = $region29
    $region28: #{tpu_custom_call.1} parent=1 // pred_region
      %s255 = ssub.s32 128, 128
      %256 = vsyncadd [#allocation7], %s255
      %s258 = sshll.u32 [#allocation10], 4
      %s259 = int_to_ptr.vmem [resolvable:$true] %s258
      %261 = dma.vmem_to_hbm [thread:$0]  %s259, 128, %s2, [#allocation7]
    $region29: #{tpu_custom_call.1} parent=1 // pred_fallthru
      _
    // Predicated region
    $region30: #{tpu_custom_call.1} parent=1 // pred_check
      _
    $region31: #{tpu_custom_call.1} parent=1 // pred_check_branch
      %263 = sbr.rel (0) target = $region33
    $region32: #{tpu_custom_call.1} parent=1 // pred_region
      %264 = dma.done [#allocation7], 128
    $region33: #{tpu_custom_call.1} parent=1 // pred_fallthru
      _
    %265 = vsyncpa [#allocation6], 1
    %266 = vsyncpa [#allocation9], 1
    %267 = vsyncpa [#allocation7], 1

</llo_original>
